<compile_context>
chip_gen: v6e
topology: v6e:2x2x1
jax: 0.10.0
libtpu: 0.0.40
codegen_flags: <defaults>
</compile_context>

<pallas_src>
import jax
import jax.numpy as jnp
from jax.experimental import pallas as pl
from jax.experimental.pallas import tpu as pltpu

LATENT = 8           # latent_space
HALF = LATENT // 2   # latent_space // 2
HIDDEN = 64
BATCH = 8            # rows per independent forward pass (per BatchNorm group)
EPS = 1e-5

# Packed-parameter row layout: (PACK_TOTAL_ROWS, HIDDEN) f32
ROW_W1 = 0                      # rows [0, HALF)        : W1   (HALF, HIDDEN)
ROW_W3T = HALF                  # rows [HALF, 2*HALF)   : W3^T (HALF, HIDDEN)
ROW_B1 = 2 * HALF               # row 8  : b1
ROW_B2 = ROW_B1 + 1             # row 9  : b2
ROW_GAMMA = ROW_B1 + 2          # row 10 : gamma
ROW_BETA = ROW_B1 + 3           # row 11 : beta
ROW_B3 = ROW_B1 + 4             # row 12 : b3 (first HALF lanes, rest zero)
N_ROWS = ROW_B3 + 1             # 13 used small-param rows
PACK_ROWS = 16                  # small params padded to a sublane-aligned row count
ROW_W2 = PACK_ROWS              # rows [16, 16+HIDDEN)  : W2 (HIDDEN, HIDDEN)
PACK_TOTAL_ROWS = PACK_ROWS + HIDDEN   # 80 rows total


def generator_kernel(x_ref, p_ref, o_ref):
    x = x_ref[...]                                 # (BATCH, LATENT)
    s2 = x[:, HALF:]                               # (BATCH, HALF)

    w1 = p_ref[ROW_W1:ROW_W1 + HALF, :]            # (HALF, HIDDEN)
    w3t = p_ref[ROW_W3T:ROW_W3T + HALF, :]         # (HALF, HIDDEN) = W3^T
    b1 = p_ref[ROW_B1:ROW_B1 + 1, :]               # (1, HIDDEN)
    b2 = p_ref[ROW_B2:ROW_B2 + 1, :]
    gamma = p_ref[ROW_GAMMA:ROW_GAMMA + 1, :]
    beta = p_ref[ROW_BETA:ROW_BETA + 1, :]
    b3 = p_ref[ROW_B3:ROW_B3 + 1, :]               # (1, HIDDEN); lanes >= HALF are zero
    w2 = p_ref[ROW_W2:ROW_W2 + HIDDEN, :]          # (HIDDEN, HIDDEN)

    # layer_1 + ReLU: K=4 contraction unrolled as broadcast FMAs on the VPU
    # (avoids an extra dependent MXU pass for a degenerate matmul).
    h = jnp.broadcast_to(b1, (BATCH, HIDDEN))
    for k in range(HALF):
        h = h + s2[:, k:k + 1] * w1[k:k + 1, :]
    h = jnp.maximum(h, 0.0)

    # layer_2: the only MXU matmul (HIDDEN x HIDDEN).
    h = jnp.dot(h, w2, preferred_element_type=jnp.float32) + b2

    # BatchNorm1d (training mode: batch mean, biased variance) + ReLU.
    # Single reduction pass: sum and sum-of-squares; 1/B is a compile-time constant.
    inv_b = 1.0 / BATCH
    s = jnp.sum(h, axis=0, keepdims=True)
    ss = jnp.sum(h * h, axis=0, keepdims=True)
    mean = s * inv_b
    var = ss * inv_b - mean * mean
    h = (h - mean) * jax.lax.rsqrt(var + EPS)
    h = jnp.maximum(h * gamma + beta, 0.0)

    # Fused split/concat: pass-through half goes straight to the output lanes.
    o_ref[:, :HALF] = x[:, :HALF]

    # layer_3: N=4 output columns as lane-reduction dots (VPU mul + XLU reduce),
    # each stored directly into its output lane (no tail concatenate).
    for j in range(HALF):
        col = jnp.sum(h * w3t[j:j + 1, :], axis=-1, keepdims=True)
        o_ref[:, HALF + j:HALF + j + 1] = col + b3[:, j:j + 1]


def pack_params(params):
    """Pack ALL parameters (incl. W2) into a single (PACK_TOTAL_ROWS, HIDDEN) f32 buffer."""
    w1, b1, w2, b2, gamma, beta, w3, b3 = params
    b3_pad = jnp.zeros((1, HIDDEN), jnp.float32).at[:, :HALF].set(b3)
    pad = jnp.zeros((PACK_ROWS - N_ROWS, HIDDEN), jnp.float32)
    return jnp.concatenate([w1, w3.T, b1, b2, gamma, beta, b3_pad, pad, w2], axis=0)


def generator_forward(x, packed):
    """x: (G*BATCH, LATENT), interpreted as G independent forward passes of BATCH rows."""
    assert x.shape[0] % BATCH == 0 and x.shape[1] == LATENT
    num_groups = x.shape[0] // BATCH
    return pl.pallas_call(
        generator_kernel,
        out_shape=jax.ShapeDtypeStruct((num_groups * BATCH, LATENT), jnp.float32),
        grid=(num_groups,),
        in_specs=[
            pl.BlockSpec((BATCH, LATENT), lambda g: (g, 0)),
            pl.BlockSpec((PACK_TOTAL_ROWS, HIDDEN), lambda g: (0, 0)),  # resident params
        ],
        out_specs=pl.BlockSpec((BATCH, LATENT), lambda g: (g, 0)),
        compiler_params=pltpu.CompilerParams(dimension_semantics=("parallel",)),
    )(x, packed)


def reference_forward(x, params):
    (w1, b1, w2, b2, gamma, beta, w3, b3) = params

    def one_batch(xb):
        s1, s2 = xb[:, :HALF], xb[:, HALF:]
        h = jnp.maximum(s2 @ w1 + b1, 0.0)
        h = h @ w2 + b2
        mean = jnp.mean(h, axis=0, keepdims=True)
        var = jnp.mean((h - mean) ** 2, axis=0, keepdims=True)
        h = jnp.maximum((h - mean) * jax.lax.rsqrt(var + EPS) * gamma + beta, 0.0)
        h = h @ w3 + b3
        return jnp.concatenate([s1, h], axis=1)

    groups = x.reshape(-1, BATCH, LATENT)
    return jnp.concatenate([one_batch(groups[g]) for g in range(groups.shape[0])], axis=0)


def init_params(key):
    ks = jax.random.split(key, 6)
    w1 = 0.1 * jax.random.normal(ks[0], (HALF, HIDDEN), jnp.float32)
    b1 = 0.1 * jax.random.normal(ks[1], (1, HIDDEN), jnp.float32)
    w2 = 0.1 * jax.random.normal(ks[2], (HIDDEN, HIDDEN), jnp.float32)
    b2 = 0.1 * jax.random.normal(ks[3], (1, HIDDEN), jnp.float32)
    gamma = jnp.ones((1, HIDDEN), jnp.float32)     # BatchNorm1d affine init
    beta = jnp.zeros((1, HIDDEN), jnp.float32)
    w3 = 0.1 * jax.random.normal(ks[4], (HIDDEN, HALF), jnp.float32)
    b3 = 0.1 * jax.random.normal(ks[5], (1, HALF), jnp.float32)
    return (w1, b1, w2, b2, gamma, beta, w3, b3)


if __name__ == "__main__":
    NUM_GROUPS = 4   # 4 independent batches of 8 rows processed in one pallas_call
    key = jax.random.PRNGKey(0)
    kx, kp = jax.random.split(key)
    x = jax.random.normal(kx, (NUM_GROUPS * BATCH, LATENT), jnp.float32)
    params = init_params(kp)
    packed = pack_params(params)     # one-time parameter packing outside the kernel

    out = generator_forward(x, packed)
    out = jax.block_until_ready(out)

    ref = reference_forward(x, params)
    assert out.shape == (NUM_GROUPS * BATCH, LATENT)
    assert jnp.allclose(out, ref, atol=1e-4, rtol=1e-4), "mismatch vs reference"
    print("KERNEL_OK")
</pallas_src>

<mosaic_0001>
module attributes {stable_mosaic.version = 11 : i64} {
  func.func @generator_kernel(%arg0: i32, %arg1: memref<8x8xf32, #tpu.memory_space<vmem>>, %arg2: memref<80x64xf32, #tpu.memory_space<vmem>>, %arg3: memref<8x8xf32, #tpu.memory_space<vmem>>) attributes {dimension_semantics = [#tpu.dimension_semantics<parallel>], iteration_bounds = array<i64: 4>, scalar_prefetch = 0 : i64, scratch_operands = 0 : i64, tpu.core_type = #tpu.core_type<tc>, window_params = [{transform_indices = @transform_0, window_bounds = array<i64: 8, 8>}, {pipeline_mode = #tpu.pipeline_mode<synchronous>, transform_indices = @transform_1, window_bounds = array<i64: 80, 64>}, {transform_indices = @transform_2, window_bounds = array<i64: 8, 8>}]} {
    %c0 = arith.constant 0 : index
    %c0_0 = arith.constant 0 : index
    %0 = vector.load %arg1[%c0, %c0_0] : memref<8x8xf32, #tpu.memory_space<vmem>>, vector<8x8xf32>
    %1 = vector.extract_strided_slice %0 {offsets = [0, 4], sizes = [8, 4], strides = [1, 1]} : vector<8x8xf32> to vector<8x4xf32>
    %c0_1 = arith.constant 0 : index
    %c0_2 = arith.constant 0 : index
    %2 = vector.load %arg2[%c0_1, %c0_2] : memref<80x64xf32, #tpu.memory_space<vmem>>, vector<4x64xf32>
    %c4 = arith.constant 4 : index
    %c0_3 = arith.constant 0 : index
    %3 = vector.load %arg2[%c4, %c0_3] : memref<80x64xf32, #tpu.memory_space<vmem>>, vector<4x64xf32>
    %c8 = arith.constant 8 : index
    %c0_4 = arith.constant 0 : index
    %4 = vector.load %arg2[%c8, %c0_4] : memref<80x64xf32, #tpu.memory_space<vmem>>, vector<1x64xf32>
    %c9 = arith.constant 9 : index
    %c0_5 = arith.constant 0 : index
    %5 = vector.load %arg2[%c9, %c0_5] : memref<80x64xf32, #tpu.memory_space<vmem>>, vector<1x64xf32>
    %c10 = arith.constant 10 : index
    %c0_6 = arith.constant 0 : index
    %6 = vector.load %arg2[%c10, %c0_6] : memref<80x64xf32, #tpu.memory_space<vmem>>, vector<1x64xf32>
    %c11 = arith.constant 11 : index
    %c0_7 = arith.constant 0 : index
    %7 = vector.load %arg2[%c11, %c0_7] : memref<80x64xf32, #tpu.memory_space<vmem>>, vector<1x64xf32>
    %c12 = arith.constant 12 : index
    %c0_8 = arith.constant 0 : index
    %8 = vector.load %arg2[%c12, %c0_8] : memref<80x64xf32, #tpu.memory_space<vmem>>, vector<1x64xf32>
    %c16 = arith.constant 16 : index
    %c0_9 = arith.constant 0 : index
    %9 = vector.load %arg2[%c16, %c0_9] : memref<80x64xf32, #tpu.memory_space<vmem>>, vector<64x64xf32>
    %10 = vector.shape_cast %4 : vector<1x64xf32> to vector<1x64xf32>
    %11 = vector.broadcast %10 : vector<1x64xf32> to vector<8x64xf32>
    %12 = vector.extract_strided_slice %1 {offsets = [0, 0], sizes = [8, 1], strides = [1, 1]} : vector<8x4xf32> to vector<8x1xf32>
    %13 = vector.extract_strided_slice %2 {offsets = [0, 0], sizes = [1, 64], strides = [1, 1]} : vector<4x64xf32> to vector<1x64xf32>
    %14 = vector.broadcast %12 : vector<8x1xf32> to vector<8x64xf32>
    %15 = vector.broadcast %13 : vector<1x64xf32> to vector<8x64xf32>
    %16 = arith.mulf %14, %15 : vector<8x64xf32>
    %17 = arith.addf %11, %16 : vector<8x64xf32>
    %18 = vector.extract_strided_slice %1 {offsets = [0, 1], sizes = [8, 1], strides = [1, 1]} : vector<8x4xf32> to vector<8x1xf32>
    %19 = vector.extract_strided_slice %2 {offsets = [1, 0], sizes = [1, 64], strides = [1, 1]} : vector<4x64xf32> to vector<1x64xf32>
    %20 = vector.broadcast %18 : vector<8x1xf32> to vector<8x64xf32>
    %21 = vector.broadcast %19 : vector<1x64xf32> to vector<8x64xf32>
    %22 = arith.mulf %20, %21 : vector<8x64xf32>
    %23 = arith.addf %17, %22 : vector<8x64xf32>
    %24 = vector.extract_strided_slice %1 {offsets = [0, 2], sizes = [8, 1], strides = [1, 1]} : vector<8x4xf32> to vector<8x1xf32>
    %25 = vector.extract_strided_slice %2 {offsets = [2, 0], sizes = [1, 64], strides = [1, 1]} : vector<4x64xf32> to vector<1x64xf32>
    %26 = vector.broadcast %24 : vector<8x1xf32> to vector<8x64xf32>
    %27 = vector.broadcast %25 : vector<1x64xf32> to vector<8x64xf32>
    %28 = arith.mulf %26, %27 : vector<8x64xf32>
    %29 = arith.addf %23, %28 : vector<8x64xf32>
    %30 = vector.extract_strided_slice %1 {offsets = [0, 3], sizes = [8, 1], strides = [1, 1]} : vector<8x4xf32> to vector<8x1xf32>
    %31 = vector.extract_strided_slice %2 {offsets = [3, 0], sizes = [1, 64], strides = [1, 1]} : vector<4x64xf32> to vector<1x64xf32>
    %32 = vector.broadcast %30 : vector<8x1xf32> to vector<8x64xf32>
    %33 = vector.broadcast %31 : vector<1x64xf32> to vector<8x64xf32>
    %34 = arith.mulf %32, %33 : vector<8x64xf32>
    %35 = arith.addf %29, %34 : vector<8x64xf32>
    %cst = arith.constant 0.000000e+00 : f32
    %36 = vector.broadcast %cst : f32 to vector<8x64xf32>
    %37 = arith.maximumf %35, %36 : vector<8x64xf32>
    %cst_10 = arith.constant dense<0.000000e+00> : vector<8x64xf32>
    %38 = tpu.matmul %37, %9, %cst_10 {dimension_numbers = #tpu.dot_dimension_numbers<[1], [0], [0], [1], [0, 0, 1, 1], [], []>} : vector<8x64xf32>, vector<64x64xf32>, vector<8x64xf32> -> vector<8x64xf32>
    %39 = vector.broadcast %5 : vector<1x64xf32> to vector<8x64xf32>
    %40 = arith.addf %38, %39 : vector<8x64xf32>
    %cst_11 = arith.constant dense<0.000000e+00> : vector<64xf32>
    %41 = vector.multi_reduction <add>, %40, %cst_11 [0] : vector<8x64xf32> to vector<64xf32>
    %42 = vector.shape_cast %41 : vector<64xf32> to vector<1x64xf32>
    %43 = arith.mulf %40, %40 : vector<8x64xf32>
    %cst_12 = arith.constant dense<0.000000e+00> : vector<64xf32>
    %44 = vector.multi_reduction <add>, %43, %cst_12 [0] : vector<8x64xf32> to vector<64xf32>
    %45 = vector.shape_cast %44 : vector<64xf32> to vector<1x64xf32>
    %cst_13 = arith.constant 1.250000e-01 : f32
    %46 = vector.broadcast %cst_13 : f32 to vector<1x64xf32>
    %47 = arith.mulf %42, %46 : vector<1x64xf32>
    %cst_14 = arith.constant 1.250000e-01 : f32
    %48 = vector.broadcast %cst_14 : f32 to vector<1x64xf32>
    %49 = arith.mulf %45, %48 : vector<1x64xf32>
    %50 = arith.mulf %47, %47 : vector<1x64xf32>
    %51 = arith.subf %49, %50 : vector<1x64xf32>
    %52 = vector.broadcast %47 : vector<1x64xf32> to vector<8x64xf32>
    %53 = arith.subf %40, %52 : vector<8x64xf32>
    %cst_15 = arith.constant 9.99999974E-6 : f32
    %54 = vector.broadcast %cst_15 : f32 to vector<1x64xf32>
    %55 = arith.addf %51, %54 : vector<1x64xf32>
    %56 = math.rsqrt %55 : vector<1x64xf32>
    %57 = vector.broadcast %56 : vector<1x64xf32> to vector<8x64xf32>
    %58 = arith.mulf %53, %57 : vector<8x64xf32>
    %59 = vector.broadcast %6 : vector<1x64xf32> to vector<8x64xf32>
    %60 = arith.mulf %58, %59 : vector<8x64xf32>
    %61 = vector.broadcast %7 : vector<1x64xf32> to vector<8x64xf32>
    %62 = arith.addf %60, %61 : vector<8x64xf32>
    %cst_16 = arith.constant 0.000000e+00 : f32
    %63 = vector.broadcast %cst_16 : f32 to vector<8x64xf32>
    %64 = arith.maximumf %62, %63 : vector<8x64xf32>
    %65 = vector.extract_strided_slice %0 {offsets = [0, 0], sizes = [8, 4], strides = [1, 1]} : vector<8x8xf32> to vector<8x4xf32>
    %c0_17 = arith.constant 0 : index
    %c0_18 = arith.constant 0 : index
    %66 = vector.load %arg3[%c0_17, %c0_18] : memref<8x8xf32, #tpu.memory_space<vmem>>, vector<8x4xf32>
    tpu.vector_store %arg3[%c0_17, %c0_18], %65 {strides = array<i32>} : memref<8x8xf32, #tpu.memory_space<vmem>>, vector<8x4xf32>,
    %67 = vector.extract_strided_slice %3 {offsets = [0, 0], sizes = [1, 64], strides = [1, 1]} : vector<4x64xf32> to vector<1x64xf32>
    %68 = vector.broadcast %67 : vector<1x64xf32> to vector<8x64xf32>
    %69 = arith.mulf %64, %68 : vector<8x64xf32>
    %cst_19 = arith.constant dense<0.000000e+00> : vector<8xf32>
    %70 = vector.multi_reduction <add>, %69, %cst_19 [1] : vector<8x64xf32> to vector<8xf32>
    %71 = vector.shape_cast %70 : vector<8xf32> to vector<8x1xf32>
    %72 = vector.extract_strided_slice %8 {offsets = [0, 0], sizes = [1, 1], strides = [1, 1]} : vector<1x64xf32> to vector<1x1xf32>
    %73 = vector.broadcast %72 : vector<1x1xf32> to vector<8x1xf32>
    %74 = arith.addf %71, %73 : vector<8x1xf32>
    %c0_20 = arith.constant 0 : index
    %c4_21 = arith.constant 4 : index
    %75 = vector.load %arg3[%c0_20, %c4_21] : memref<8x8xf32, #tpu.memory_space<vmem>>, vector<8x1xf32>
    tpu.vector_store %arg3[%c0_20, %c4_21], %74 {strides = array<i32>} : memref<8x8xf32, #tpu.memory_space<vmem>>, vector<8x1xf32>,
    %76 = vector.extract_strided_slice %3 {offsets = [1, 0], sizes = [1, 64], strides = [1, 1]} : vector<4x64xf32> to vector<1x64xf32>
    %77 = vector.broadcast %76 : vector<1x64xf32> to vector<8x64xf32>
    %78 = arith.mulf %64, %77 : vector<8x64xf32>
    %cst_22 = arith.constant dense<0.000000e+00> : vector<8xf32>
    %79 = vector.multi_reduction <add>, %78, %cst_22 [1] : vector<8x64xf32> to vector<8xf32>
    %80 = vector.shape_cast %79 : vector<8xf32> to vector<8x1xf32>
    %81 = vector.extract_strided_slice %8 {offsets = [0, 1], sizes = [1, 1], strides = [1, 1]} : vector<1x64xf32> to vector<1x1xf32>
    %82 = vector.broadcast %81 : vector<1x1xf32> to vector<8x1xf32>
    %83 = arith.addf %80, %82 : vector<8x1xf32>
    %c0_23 = arith.constant 0 : index
    %c5 = arith.constant 5 : index
    %84 = vector.load %arg3[%c0_23, %c5] : memref<8x8xf32, #tpu.memory_space<vmem>>, vector<8x1xf32>
    tpu.vector_store %arg3[%c0_23, %c5], %83 {strides = array<i32>} : memref<8x8xf32, #tpu.memory_space<vmem>>, vector<8x1xf32>,
    %85 = vector.extract_strided_slice %3 {offsets = [2, 0], sizes = [1, 64], strides = [1, 1]} : vector<4x64xf32> to vector<1x64xf32>
    %86 = vector.broadcast %85 : vector<1x64xf32> to vector<8x64xf32>
    %87 = arith.mulf %64, %86 : vector<8x64xf32>
    %cst_24 = arith.constant dense<0.000000e+00> : vector<8xf32>
    %88 = vector.multi_reduction <add>, %87, %cst_24 [1] : vector<8x64xf32> to vector<8xf32>
    %89 = vector.shape_cast %88 : vector<8xf32> to vector<8x1xf32>
    %90 = vector.extract_strided_slice %8 {offsets = [0, 2], sizes = [1, 1], strides = [1, 1]} : vector<1x64xf32> to vector<1x1xf32>
    %91 = vector.broadcast %90 : vector<1x1xf32> to vector<8x1xf32>
    %92 = arith.addf %89, %91 : vector<8x1xf32>
    %c0_25 = arith.constant 0 : index
    %c6 = arith.constant 6 : index
    %93 = vector.load %arg3[%c0_25, %c6] : memref<8x8xf32, #tpu.memory_space<vmem>>, vector<8x1xf32>
    tpu.vector_store %arg3[%c0_25, %c6], %92 {strides = array<i32>} : memref<8x8xf32, #tpu.memory_space<vmem>>, vector<8x1xf32>,
    %94 = vector.extract_strided_slice %3 {offsets = [3, 0], sizes = [1, 64], strides = [1, 1]} : vector<4x64xf32> to vector<1x64xf32>
    %95 = vector.broadcast %94 : vector<1x64xf32> to vector<8x64xf32>
    %96 = arith.mulf %64, %95 : vector<8x64xf32>
    %cst_26 = arith.constant dense<0.000000e+00> : vector<8xf32>
    %97 = vector.multi_reduction <add>, %96, %cst_26 [1] : vector<8x64xf32> to vector<8xf32>
    %98 = vector.shape_cast %97 : vector<8xf32> to vector<8x1xf32>
    %99 = vector.extract_strided_slice %8 {offsets = [0, 3], sizes = [1, 1], strides = [1, 1]} : vector<1x64xf32> to vector<1x1xf32>
    %100 = vector.broadcast %99 : vector<1x1xf32> to vector<8x1xf32>
    %101 = arith.addf %98, %100 : vector<8x1xf32>
    %c0_27 = arith.constant 0 : index
    %c7 = arith.constant 7 : index
    %102 = vector.load %arg3[%c0_27, %c7] : memref<8x8xf32, #tpu.memory_space<vmem>>, vector<8x1xf32>
    tpu.vector_store %arg3[%c0_27, %c7], %101 {strides = array<i32>} : memref<8x8xf32, #tpu.memory_space<vmem>>, vector<8x1xf32>,
    return
  }
  func.func @transform_0(%arg0: i32) -> (i32, i32) {
    %c0_i32 = arith.constant 0 : i32
    %c0_i32_0 = arith.constant 0 : i32
    return %arg0, %c0_i32 : i32, i32
  }
  func.func @transform_1(%arg0: i32) -> (i32, i32) {
    %c0_i32 = arith.constant 0 : i32
    %c0_i32_0 = arith.constant 0 : i32
    %c0_i32_1 = arith.constant 0 : i32
    return %c0_i32, %c0_i32_0 : i32, i32
  }
  func.func @transform_2(%arg0: i32) -> (i32, i32) {
    %c0_i32 = arith.constant 0 : i32
    %c0_i32_0 = arith.constant 0 : i32
    return %arg0, %c0_i32 : i32, i32
  }
}

</mosaic_0001>

<llo_original>
// kernel: tpu_custom_call.1
$region0: #{tpu_custom_call.1}
  #allocation0 [shape = 'u32[]', space=smem, size = 0x4, offset = 0x4, fixed_abs, tag = 'smem constant byte address 0x4 - core index']
  #allocation1 [shape = 'u32[144,128]{1,0:T(1,128)}', space=vmem, size = 0x12000, scoped, tag = 'internal scratch']
  %s0 = inlined_call_operand.vmem [shape: f32[32,8], index: 0, kind: input, shape index: {}]
  %s1 = inlined_call_operand.vmem [shape: f32[80,64], index: 1, kind: input, shape index: {}]
  %s2 = inlined_call_operand.vmem [shape: f32[32,8], index: 2, kind: output, shape index: {}]
  %s3 = sld [smem:[#allocation0]]
  $region41: #{tpu_custom_call.1} parent=0
    _
  %s5 = ssub.s32 1, %s3
  %s6 = scalar_select 0, %s5, %s3
  loop: start=0, step=1, limit=6
  $region2: #{tpu_custom_call.1} parent=0 // loop_pre_header
    _
  $region3: #{tpu_custom_call.1} parent=0 // loop_header
    %s8 = sphi 0, %s12
    %p9 = scmp.ge.s32.totalorder %s8, 6
    %s18 = sphi 0, %s20
    %s21 = sphi 0, %s18
    %s22 = sphi 0, %s21
    %s38 = sphi 0, %s22
    %s42 = sphi 0, %s42
    %s44 = sphi 0, %s42
    %s45 = sphi 0, %s44
    %s59 = sphi 0, %s45
    %s65 = sphi 0, %s67
    %s68 = sphi 0, %s65
    %s69 = sphi 0, %s68
    %s85 = sphi 0, %s69
  $region4: #{tpu_custom_call.1} parent=0 // loop_header_branch
    %11 = sbr.rel (%p9) target = $region8
  $region5: #{tpu_custom_call.1} parent=0 // loop_body
    %s13 = ssub.s32 %s8, 1
    %s14 = ssub.s32 %s8, 2
    %s15 = sadd.s32 %s8, 1
    %s16 = ssub.s32 %s8, %s15
    %p17 = scmp.eq.s32.totalorder %s16, 0
    %s19 = sadd.s32 %s18, 1
    %s20 = scalar_select %p17, %s18, %s19
    %p23 = pneg %p17
    %p24 = scmp.eq.s32.totalorder %s8, 3
    %p25 = por %p23, %p24
    %p26 = scmp.ne.s32.totalorder %s18, %s21
    %p27 = scmp.eq.s32.totalorder %s8, 0
    %p28 = por %p26, %p27
    %p29 = scmp.ne.s32.totalorder %s18, %s21
    %p30 = scmp.eq.s32.totalorder %s13, 3
    %p31 = por %p29, %p30
    %p32 = scmp.ne.s32.totalorder %s21, %s22
    %p33 = scmp.eq.s32.totalorder %s13, 0
    %p34 = por %p32, %p33
    %p35 = scmp.ne.s32.totalorder %s21, %s22
    %p36 = scmp.eq.s32.totalorder %s14, 3
    %p37 = por %p35, %p36
    %p39 = scmp.ne.s32.totalorder %s22, %s38
    %p40 = scmp.eq.s32.totalorder %s14, 0
    %p41 = por %p39, %p40
    %s43 = sadd.s32 %s42, 1
    %p46 = scmp.eq.s32.totalorder %s8, 3
    %p47 = scmp.ne.s32.totalorder %s42, %s44
    %p48 = scmp.eq.s32.totalorder %s8, 0
    %p49 = por %p47, %p48
    %p50 = scmp.ne.s32.totalorder %s42, %s44
    %p51 = scmp.eq.s32.totalorder %s13, 3
    %p52 = por %p50, %p51
    %p53 = scmp.ne.s32.totalorder %s44, %s45
    %p54 = scmp.eq.s32.totalorder %s13, 0
    %p55 = por %p53, %p54
    %p56 = scmp.ne.s32.totalorder %s44, %s45
    %p57 = scmp.eq.s32.totalorder %s14, 3
    %p58 = por %p56, %p57
    %p60 = scmp.ne.s32.totalorder %s45, %s59
    %p61 = scmp.eq.s32.totalorder %s14, 0
    %p62 = por %p60, %p61
    %s63 = ssub.s32 %s8, %s15
    %p64 = scmp.eq.s32.totalorder %s63, 0
    %s66 = sadd.s32 %s65, 1
    %s67 = scalar_select %p64, %s65, %s66
    %p70 = pneg %p64
    %p71 = scmp.eq.s32.totalorder %s8, 3
    %p72 = por %p70, %p71
    %p73 = scmp.ne.s32.totalorder %s65, %s68
    %p74 = scmp.eq.s32.totalorder %s8, 0
    %p75 = por %p73, %p74
    %p76 = scmp.ne.s32.totalorder %s65, %s68
    %p77 = scmp.eq.s32.totalorder %s13, 3
    %p78 = por %p76, %p77
    %p79 = scmp.ne.s32.totalorder %s68, %s69
    %p80 = scmp.eq.s32.totalorder %s13, 0
    %p81 = por %p79, %p80
    %p82 = scmp.ne.s32.totalorder %s68, %s69
    %p83 = scmp.eq.s32.totalorder %s14, 3
    %p84 = por %p82, %p83
    %p86 = scmp.ne.s32.totalorder %s69, %s85
    %p87 = scmp.eq.s32.totalorder %s14, 0
    %p88 = por %p86, %p87
    %p89 = scmp.le.s32.totalorder 1, %s8
    %p90 = scmp.lt.s32.totalorder %s8, 5
    %p91 = pnand %p89, %p90
    %p92 = pneg %p91
    // Predicated region
    $region9: #{tpu_custom_call.1} parent=5 // pred_check
      _
    $region10: #{tpu_custom_call.1} parent=5 // pred_check_branch
      %94 = sbr.rel (%p91) target = $region12
    $region11: #{tpu_custom_call.1} parent=5 // pred_region
      %s95 = ssub.s32 %s8, 1
      // Predicated region
      $region13: #{tpu_custom_call.1} parent=11 // pred_check
        %p96 = pneg %p55
      $region14: #{tpu_custom_call.1} parent=11 // pred_check_branch
        %98 = sbr.rel (%p96) target = $region16
      $region15: #{tpu_custom_call.1} parent=11 // pred_region
        _
      $region16: #{tpu_custom_call.1} parent=11 // pred_fallthru
        _
    $region12: #{tpu_custom_call.1} parent=5 // pred_fallthru
      _
    %p99 = scmp.lt.s32.totalorder %s8, 4
    // Predicated region
    $region17: #{tpu_custom_call.1} parent=5 // pred_check
      %p100 = pneg %p99
    $region18: #{tpu_custom_call.1} parent=5 // pred_check_branch
      %102 = sbr.rel (%p100) target = $region20
    $region19: #{tpu_custom_call.1} parent=5 // pred_region
      // Predicated region
      $region21: #{tpu_custom_call.1} parent=19 // pred_check
        %p103 = pneg %p28
      $region22: #{tpu_custom_call.1} parent=19 // pred_check_branch
        %105 = sbr.rel (%p103) target = $region24
      $region23: #{tpu_custom_call.1} parent=19 // pred_region
        %p106 = scmp.lt.s32.totalorder %s8, 3
        %s107 = scalar_select %p106, %s8, 3
        %s108 = smul.addr %s107, 8
        %s109 = scalar_lea.vmem %s0, %s108
      $region24: #{tpu_custom_call.1} parent=19 // pred_fallthru
        _
    $region20: #{tpu_custom_call.1} parent=5 // pred_fallthru
      _
    %p110 = scmp.le.s32.totalorder 1, %s8
    %p111 = scmp.lt.s32.totalorder %s8, 5
    %p112 = pnand %p110, %p111
    %p113 = pneg %p112
    // Predicated region
    $region25: #{tpu_custom_call.1} parent=5 // pred_check
      _
    $region26: #{tpu_custom_call.1} parent=5 // pred_check_branch
      %115 = sbr.rel (%p112) target = $region28
    $region27: #{tpu_custom_call.1} parent=5 // pred_region
      %s116 = ssub.s32 %s8, 1
      %p117 = scmp.lt.s32.totalorder %s13, 3
      %s118 = scalar_select %p117, %s13, 3
      %s119 = smul.addr %s118, 8
      %s120 = scalar_lea.vmem %s0, %s119
      %p121 = pneg %p34
      %p122 = pneg %p31
      %p123 = pneg %p55
      %p124 = pneg %p52
      %p125 = pneg %p81
      %p126 = pneg %p78
      %p127 = scmp.lt.s32.totalorder %s13, 3
      %s128 = scalar_select %p127, %s13, 3
      %s129 = smul.addr %s128, 8
      %s130 = scalar_lea.vmem %s2, %s129
      %p131 = scmp.lt.s32.totalorder %s13, 3
      %s132 = scalar_select %p131, %s13, 3
      %s133 = smul.addr %s132, 8
      %s134 = scalar_lea.vmem %s0, %s133
      %p135 = scmp.lt.s32.totalorder %s13, 3
      %s136 = scalar_select %p135, %s13, 3
      %s137 = smul.addr %s136, 8
      %s138 = scalar_lea.vmem %s2, %s137
      %v139 = vld [vmem:[%s134] sm:$0xff]
      %v140 = vld [vmem:[%s1] sm:$0xf]
      %v141 = vld [vmem:[%s1 + $0x4] sm:$0xf]
      %v142 = vld [vmem:[%s1 + $0x8] sm:$0x1]
      %v143 = vld [vmem:[%s1 + $0x9] sm:$0x1]
      %v144 = vld [vmem:[%s1 + $0xa] sm:$0x1]
      %v145 = vld [vmem:[%s1 + $0xb] sm:$0x1]
      %v146 = vld [vmem:[%s1 + $0xc] sm:$0x1]
      %v147 = vld [vmem:[%s1 + $0x10] sm:$0xff]
      %v148 = vld [vmem:[%s1 + $0x18] sm:$0xff]
      %v149 = vld [vmem:[%s1 + $0x20] sm:$0xff]
      %v150 = vld [vmem:[%s1 + $0x28] sm:$0xff]
      %v151 = vld [vmem:[%s1 + $0x30] sm:$0xff]
      %v152 = vld [vmem:[%s1 + $0x38] sm:$0xff]
      %v153 = vld [vmem:[%s1 + $0x40] sm:$0xff]
      %v154 = vld [vmem:[%s1 + $0x48] sm:$0xff]
      %v155 = vlaneseq
      %v156 = vshrl.u32 %v155, 7
      %v157 = vsub.s32 0, %v156
      %v158 = vrot.slane %v142, %v157
      %160 = vset.pattern.permute.xlu0 4
      %161 = vperm.xlu0 %160, %v139
      %v162 = vpop.permute.xlu0 %161
      %v164 = vlaneseq
      %v165 = vshrl.u32 %v164, 7
      %v166 = vsub.s32 0, %v165
      %v167 = vrot.slane %v140, %v166
      %v168 = vmul.f32 %v162, %v167
      %v169 = vadd.f32 %v158, %v168
      %170 = vset.pattern.permute.xlu0 5
      %171 = vperm.xlu0 %170, %v139
      %v172 = vpop.permute.xlu0 %171
      %v174 = vlaneseq
      %v175 = vshrl.u32 %v174, 7
      %v176 = vsub.s32 1, %v175
      %v177 = vrot.slane %v140, %v176
      %v178 = vmul.f32 %v172, %v177
      %v179 = vadd.f32 %v169, %v178
      %180 = vset.pattern.permute.xlu0 6
      %181 = vperm.xlu0 %180, %v139
      %v182 = vpop.permute.xlu0 %181
      %v184 = vlaneseq
      %v185 = vshrl.u32 %v184, 7
      %v186 = vsub.s32 2, %v185
      %v187 = vrot.slane %v140, %v186
      %v188 = vmul.f32 %v182, %v187
      %v189 = vadd.f32 %v179, %v188
      %190 = vset.pattern.permute.xlu0 7
      %191 = vperm.xlu0 %190, %v139
      %v192 = vpop.permute.xlu0 %191
      %v194 = vlaneseq
      %v195 = vshrl.u32 %v194, 7
      %v196 = vsub.s32 3, %v195
      %v197 = vrot.slane %v140, %v196
      %v198 = vmul.f32 %v192, %v197
      %v199 = vadd.f32 %v189, %v198
      %v200 = vmax.f32 %v199, 0.0
      %v201 = vlaneseq
      %v202 = vshrl.u32 %v201, 7
      %v203 = vsub.s32 0, %v202
      %v204 = vrot.slane %v143, %v203
      %vm205 = vcmask 523264
      %v207 = vsel %vm205, %v200, 0
      %209 = vmatprep.subr.mxu0 0.0
      %210 = vmatpush1.msra.mxu0 0.0
      %211 = vmatprep.subr.mxu0 0.0
      %212 = vmatpush1.msra.mxu0 0.0
      %213 = vmatprep.subr.mxu0 0.0
      %214 = vmatpush1.msra.mxu0 0.0
      %215 = vmatprep.subr.mxu0 0.0
      %216 = vmatpush1.msra.mxu0 0.0
      %217 = vmatprep.subr.mxu0 0.0
      %218 = vmatpush1.msra.mxu0 0.0
      %219 = vmatprep.subr.mxu0 0.0
      %220 = vmatpush1.msra.mxu0 0.0
      %221 = vmatprep.subr.mxu0 0.0
      %222 = vmatpush1.msra.mxu0 0.0
      %223 = vmatprep.subr.mxu0 0.0
      %224 = vmatpush1.msra.mxu0 0.0
      %225 = vmatprep.subr.mxu0 0.0
      %226 = vmatpush1.msra.mxu0 %v154
      %227 = vmatprep.subr.mxu0 0.0
      %228 = vmatpush1.msra.mxu0 %v153
      %229 = vmatprep.subr.mxu0 0.0
      %230 = vmatpush1.msra.mxu0 %v152
      %231 = vmatprep.subr.mxu0 0.0
      %232 = vmatpush1.msra.mxu0 %v151
      %233 = vmatprep.subr.mxu0 0.0
      %234 = vmatpush1.msra.mxu0 %v150
      %235 = vmatprep.subr.mxu0 0.0
      %236 = vmatpush1.msra.mxu0 %v149
      %237 = vmatprep.subr.mxu0 0.0
      %238 = vmatpush1.msra.mxu0 %v148
      %239 = vmatprep.subr.mxu0 0.0
      %240 = vmatpush1.msra.mxu0 %v147
      %241 = vmatprep.subr.mxu0 0.0
      %242 = vmatpush2.msra.mxu0 0.0
      %243 = vmatprep.subr.mxu0 0.0
      %244 = vmatpush2.msra.mxu0 0.0
      %245 = vmatprep.subr.mxu0 0.0
      %246 = vmatpush2.msra.mxu0 0.0
      %247 = vmatprep.subr.mxu0 0.0
      %248 = vmatpush2.msra.mxu0 0.0
      %249 = vmatprep.subr.mxu0 0.0
      %250 = vmatpush2.msra.mxu0 0.0
      %251 = vmatprep.subr.mxu0 0.0
      %252 = vmatpush2.msra.mxu0 0.0
      %253 = vmatprep.subr.mxu0 0.0
      %254 = vmatpush2.msra.mxu0 0.0
      %255 = vmatprep.subr.mxu0 0.0
      %256 = vmatpush2.msra.mxu0 0.0
      %257 = vmatprep.subr.mxu0 0.0
      %258 = vmatpush2.msra.mxu0 0.0
      %259 = vmatprep.subr.mxu0 0.0
      %260 = vmatpush2.msra.mxu0 0.0
      %261 = vmatprep.subr.mxu0 0.0
      %262 = vmatpush2.msra.mxu0 0.0
      %263 = vmatprep.subr.mxu0 0.0
      %264 = vmatpush2.msra.mxu0 0.0
      %265 = vmatprep.subr.mxu0 0.0
      %266 = vmatpush2.msra.mxu0 0.0
      %267 = vmatprep.subr.mxu0 0.0
      %268 = vmatpush2.msra.mxu0 0.0
      %269 = vmatprep.subr.mxu0 0.0
      %270 = vmatpush2.msra.mxu0 0.0
      %271 = vmatprep.subr.mxu0 0.0
      %272 = vmatpush2.msra.mxu0 0.0
      %273 = vmatprep.mubr.f32.mxu0 0.0
      %274 = vmatmul.mubr.f32.gmra.mxu0 %v207
      %v275 = vpop.f32.mrf.mxu0
      %v276 = vadd.f32 %v204, %v275
      %v277 = vpop.f32.mrf.mxu0
      %278 = vdwg.mxu0
      %v279 = vsel %vm205, %v276, 0.0
      %v280 = vrot.slane %v279, 4
      %v281 = vadd.f32 %v279, %v280
      %v282 = vrot.slane %v281, 2
      %v283 = vadd.f32 %v281, %v282
      %v284 = vrot.slane %v283, 1
      %v285 = vadd.f32 %v283, %v284
      %v286 = vmul.f32 %v276, %v276
      %v287 = vsel %vm205, %v286, 0.0
      %v288 = vrot.slane %v287, 4
      %v289 = vadd.f32 %v287, %v288
      %v290 = vrot.slane %v289, 2
      %v291 = vadd.f32 %v289, %v290
      %v292 = vrot.slane %v291, 1
      %v293 = vadd.f32 %v291, %v292
      %v294 = vmul.f32 %v285, 0.125
      %v295 = vmul.f32 %v293, 0.125
      %v296 = vmul.f32 %v294, %v294
      %v297 = vsub.f32 %v295, %v296
      %v298 = vsub.f32 %v276, %v294
      %v299 = vadd.f32 %v297, 1e-05
      %v300 = vrsqrt.pop %v299
      %v301 = vmul.f32 %v298, %v300
      %v302 = vlaneseq
      %v303 = vshrl.u32 %v302, 7
      %v304 = vsub.s32 0, %v303
      %v305 = vrot.slane %v144, %v304
      %v306 = vmul.f32 %v301, %v305
      %v307 = vlaneseq
      %v308 = vshrl.u32 %v307, 7
      %v309 = vsub.s32 0, %v308
      %v310 = vrot.slane %v145, %v309
      %v311 = vadd.f32 %v306, %v310
      %v312 = vmax.f32 %v311, 0.0
      %vm313 = vcmask 31744
      %314 = vst.msk [vmem:[%s138] sm:$0xff] %vm313, %v139
      %v315 = vlaneseq
      %v316 = vshrl.u32 %v315, 7
      %v317 = vsub.s32 0, %v316
      %v318 = vrot.slane %v141, %v317
      %v319 = vmul.f32 %v312, %v318
      %v320 = vsel %vm205, %v319, 0.0
      %321 = vadd.xlane.f32.xlu0 %v320
      %v322 = vpop.xlane.xlu0 %321
      %v323 = vlaneseq
      %v324 = vshrl.u32 %v323, 7
      %v325 = vsub.s32 0, %v324
      %v326 = vrot.slane %v146, %v325
      %v327 = vadd.f32 %v322, %v326
      %329 = vrot.lane.b32.xlu0 %v327, 4
      %v330 = vpop.permute.xlu0 %329
      %vm332 = vcmask 39968
      %333 = vst.msk [vmem:[%s138] sm:$0xff] %vm332, %v330
      %v334 = vlaneseq
      %v335 = vshrl.u32 %v334, 7
      %v336 = vsub.s32 1, %v335
      %v337 = vrot.slane %v141, %v336
      %v338 = vmul.f32 %v312, %v337
      %v339 = vsel %vm205, %v338, 0.0
      %340 = vadd.xlane.f32.xlu0 %v339
      %v341 = vpop.xlane.xlu0 %340
      %v342 = vadd.f32 %v341, %v326
      %344 = vrot.lane.b32.xlu0 %v342, 4
      %v345 = vpop.permute.xlu0 %344
      %vm347 = vcmask 48168
      %348 = vst.msk [vmem:[%s138] sm:$0xff] %vm347, %v345
      %v349 = vlaneseq
      %v350 = vshrl.u32 %v349, 7
      %v351 = vsub.s32 2, %v350
      %v352 = vrot.slane %v141, %v351
      %v353 = vmul.f32 %v312, %v352
      %v354 = vsel %vm205, %v353, 0.0
      %355 = vadd.xlane.f32.xlu0 %v354
      %v356 = vpop.xlane.xlu0 %355
      %v357 = vadd.f32 %v356, %v326
      %359 = vrot.lane.b32.xlu0 %v357, 4
      %v360 = vpop.permute.xlu0 %359
      %vm362 = vcmask 56368
      %363 = vst.msk [vmem:[%s138] sm:$0xff] %vm362, %v360
      %v364 = vlaneseq
      %v365 = vshrl.u32 %v364, 7
      %v366 = vsub.s32 3, %v365
      %v367 = vrot.slane %v141, %v366
      %v368 = vmul.f32 %v312, %v367
      %v369 = vsel %vm205, %v368, 0.0
      %370 = vadd.xlane.f32.xlu0 %v369
      %v371 = vpop.xlane.xlu0 %370
      %v372 = vadd.f32 %v371, %v326
      %374 = vrot.lane.b32.xlu0 %v372, 4
      %v375 = vpop.permute.xlu0 %374
      %vm377 = vcmask 64568
      %378 = vst.msk [vmem:[%s138] sm:$0xff] %vm377, %v375
      %p379 = scmp.lt.s32.totalorder %s13, 3
      %s380 = scalar_select %p379, %s13, 3
      %s381 = smul.addr %s380, 8
      %s382 = scalar_lea.vmem %s2, %s381
      // Predicated region
      $region29: #{tpu_custom_call.1} parent=27 // pred_check
        %p383 = pneg %p78
      $region30: #{tpu_custom_call.1} parent=27 // pred_check_branch
        %385 = sbr.rel (%p383) target = $region32
      $region31: #{tpu_custom_call.1} parent=27 // pred_region
        _
      $region32: #{tpu_custom_call.1} parent=27 // pred_fallthru
        _
    $region28: #{tpu_custom_call.1} parent=5 // pred_fallthru
      _
    %p386 = scmp.le.s32.totalorder 2, %s8
    // Predicated region
    $region33: #{tpu_custom_call.1} parent=5 // pred_check
      %p387 = pneg %p386
    $region34: #{tpu_custom_call.1} parent=5 // pred_check_branch
      %389 = sbr.rel (%p387) target = $region36
    $region35: #{tpu_custom_call.1} parent=5 // pred_region
      %s390 = ssub.s32 %s8, 2
      // Predicated region
      $region37: #{tpu_custom_call.1} parent=35 // pred_check
        %p391 = pneg %p84
      $region38: #{tpu_custom_call.1} parent=35 // pred_check_branch
        %393 = sbr.rel (%p391) target = $region40
      $region39: #{tpu_custom_call.1} parent=35 // pred_region
        %p394 = scmp.lt.s32.totalorder %s14, 3
        %s395 = scalar_select %p394, %s14, 3
        %s396 = smul.addr %s395, 8
        %s397 = scalar_lea.vmem %s2, %s396
      $region40: #{tpu_custom_call.1} parent=35 // pred_fallthru
        _
    $region36: #{tpu_custom_call.1} parent=5 // pred_fallthru
      _
  $region6: #{tpu_custom_call.1} parent=0 // loop_footer
    %s12 = sadd.s32 1, %s8
  $region7: #{tpu_custom_call.1} parent=0 // loop_footer_branch
    %7 = sbr.rel target = $region3
  $region8: #{tpu_custom_call.1} parent=0 // loop_exit
    _

</llo_original>
